<compile_context>
chip_gen: v7x
topology: tpu7x:2x2x1
jax: 0.10.0
libtpu: 0.0.40
codegen_flags: <defaults>
</compile_context>

<pallas_src>
from functools import partial

import jax
import jax.numpy as jnp
from jax.experimental import pallas as pl
from jax.experimental.pallas import tpu as pltpu

_DEFAULT_TILE_B = 512     # max f32 batch-tile rows per grid step (multiple of 128)
_CHUNK = 128              # in-kernel lane sub-chunk of the batch tile


def _round_up(x, m):
    return ((x + m - 1) // m) * m


def _vmem_capacity_bytes():
    """Physical VMEM of the local TPU; fall back to the tightest generation (v7x, 64 MiB)."""
    try:
        return int(pltpu.get_tpu_info().vmem_capacity_bytes)
    except Exception:
        return 64 << 20


def _critic_kernel(xT_ref, w1T_ref, b1_ref, w2_ref, b2_ref, out_ref):
    # xT_ref : (D, TB)   VMEM batch tile, batch on the lane axis
    # w1T_ref: (H, D)    VMEM, resident across the grid (torch layout, hidden padded to 128)
    # b1_ref : (H, 1)    VMEM, resident
    # w2_ref : (1, H)    VMEM, resident (second layer as a lane-dense row)
    # b2_ref : (1,)      SMEM scalar
    # out_ref: (1, TB)   VMEM lane-dense output slab
    H = w1T_ref.shape[0]
    TB = out_ref.shape[-1]

    w1T = w1T_ref[...]
    w2 = w2_ref[...]
    b2 = b2_ref[0]
    # Hoist the lane-broadcast of b1 out of the chunk loop (JAX does not CSE broadcasts).
    b1b = jnp.broadcast_to(b1_ref[...], (H, _CHUNK))

    def chunk(c, carry):
        off = pl.multiple_of(c * _CHUNK, _CHUNK)
        xt = xT_ref[:, pl.ds(off, _CHUNK)]                                  # (D, 128)
        # Layer 1 on the MXU (K = D), f32 accumulation; hT bounded to 16 vregs.
        h = jnp.dot(w1T, xt, preferred_element_type=jnp.float32) + b1b       # (H, 128)
        # LeakyReLU(0.2): single mul + max on the VPU.
        h = jnp.maximum(h, 0.2 * h)
        # Layer 2 also on the MXU: (1, H) @ (H, 128) -> (1, 128), lane-dense, no reduce.
        v = jnp.dot(w2, h, preferred_element_type=jnp.float32) + b2
        out_ref[:, pl.ds(off, _CHUNK)] = v.astype(out_ref.dtype)
        return carry

    jax.lax.fori_loop(0, TB // _CHUNK, chunk, 0, unroll=True)


def prepare_params(w1, b1, w2, b2):
    """One-time parameter prep (hoisted out of the per-call path).

    Inputs in torch nn.Linear layout: w1 (hidden, D), b1 (hidden,), w2 (1, hidden), b2 (1,).
    Hidden is zero-padded to a multiple of 128 (exact: padded activations are 0,
    LeakyReLU(0)=0, padded w2 entries are 0).
    """
    hidden, _ = w1.shape
    H = _round_up(hidden, 128)
    pad = H - hidden
    w1T = jnp.pad(jnp.asarray(w1, jnp.float32), ((0, pad), (0, 0)))                 # (H, D)
    b1c = jnp.pad(jnp.asarray(b1, jnp.float32).reshape(-1, 1), ((0, pad), (0, 0)))  # (H, 1)
    w2r = jnp.pad(jnp.asarray(w2, jnp.float32).reshape(1, -1), ((0, 0), (0, pad)))  # (1, H)
    b2s = jnp.asarray(b2, jnp.float32).reshape(1)                                   # (1,)
    return w1T, b1c, w2r, b2s


@partial(jax.jit, static_argnames=("tile_batch",))
def critic_forward(x, w1T, b1c, w2r, b2s, *, tile_batch=_DEFAULT_TILE_B):
    """x: (B, D) f32; prepared params from prepare_params(); returns (B, 1) f32."""
    B, D = x.shape
    H = w1T.shape[0]
    tile_batch = max(128, (int(tile_batch) // 128) * 128)

    # --- batch tile size: at least 2 grid tiles whenever round_up(B,128) >= 256, so the
    # "parallel" grid axis can shard across v7x's two TensorCores.
    B128 = _round_up(B, 128)
    if B128 >= 256:
        TB = min(tile_batch, max(128, ((B128 // 2) // 128) * 128))
    else:
        TB = 128

    # --- VMEM budgeting (Pallas double-buffers every input BlockSpec, incl. the
    # constant-index weight blocks). Cap TB so the working set fits the tightest chip.
    phys_vmem = _vmem_capacity_bytes()
    weights_bytes = 2 * (H * D + 2 * H + 8) * 4          # w1T + b1 + w2 (double-buffered)
    per_row_bytes = 2 * (D + 1) * 4                      # xT tile + out slab (double-buffered)
    budget = min(40 << 20, (phys_vmem * 5) // 8)
    max_tb = max(128, ((budget - weights_bytes) // per_row_bytes // 128) * 128)
    TB = min(TB, max_tb)

    # --- single wrapper-side relayout of x: pad the batch (only up to a TB multiple) and
    # transpose so the batch sits on the lane axis; XLA fuses pad+transpose into one copy.
    Bp = _round_up(B, TB)
    if Bp != B:
        x = jnp.pad(x, ((0, Bp - B), (0, 0)))
    xT = x.T                                             # (D, Bp)
    num_tiles = Bp // TB

    vmem_bytes = weights_bytes + per_row_bytes * TB + (64 << 10)
    vmem_limit = int(min(max(vmem_bytes * 5 // 4, 32 << 20), (phys_vmem * 7) // 8))

    cost = pl.CostEstimate(
        flops=2 * Bp * D * H + 4 * Bp * H,
        transcendentals=0,
        bytes_accessed=(Bp * D + H * D + 2 * H + 1 + Bp) * 4,
    )

    out = pl.pallas_call(
        _critic_kernel,
        out_shape=jax.ShapeDtypeStruct((1, Bp), jnp.float32),
        grid_spec=pltpu.PrefetchScalarGridSpec(
            num_scalar_prefetch=0,
            grid=(num_tiles,),
            in_specs=[
                pl.BlockSpec((D, TB), lambda i: (0, i)),             # xT batch tile
                pl.BlockSpec((H, D), lambda i: (0, 0)),              # w1T, resident
                pl.BlockSpec((H, 1), lambda i: (0, 0)),              # b1 column, resident
                pl.BlockSpec((1, H), lambda i: (0, 0)),              # w2 row, resident
                pl.BlockSpec(memory_space=pltpu.MemorySpace.SMEM),   # b2 scalar
            ],
            out_specs=pl.BlockSpec((1, TB), lambda i: (0, i)),       # lane-dense output slab
        ),
        compiler_params=pltpu.CompilerParams(
            dimension_semantics=("parallel",),   # shard batch tiles across TCs (v7x: 2)
            vmem_limit_bytes=vmem_limit,
        ),
        cost_estimate=cost,
    )(xT, w1T, b1c, w2r, b2s)

    return out.reshape(Bp)[:B].reshape(B, 1)


def init_params(key, input_dims, hidden=100):
    # Torch nn.Linear layout + U(-1/sqrt(fan_in), 1/sqrt(fan_in)) init.
    k1, k2, k3, k4 = jax.random.split(key, 4)
    lim1 = 1.0 / jnp.sqrt(jnp.float32(input_dims))
    lim2 = 1.0 / jnp.sqrt(jnp.float32(hidden))
    w1 = jax.random.uniform(k1, (hidden, input_dims), jnp.float32, -lim1, lim1)
    b1 = jax.random.uniform(k2, (hidden,), jnp.float32, -lim1, lim1)
    w2 = jax.random.uniform(k3, (1, hidden), jnp.float32, -lim2, lim2)
    b2 = jax.random.uniform(k4, (1,), jnp.float32, -lim2, lim2)
    return w1, b1, w2, b2


if __name__ == "__main__":
    key = jax.random.PRNGKey(0)
    k_x, k_p, k_x2 = jax.random.split(key, 3)

    batch, input_dims = 8, 32          # small shapes consistent with CriticNetwork(input_dims=(32,))
    x = jax.random.normal(k_x, (batch, input_dims), jnp.float32)
    w1, b1, w2, b2 = init_params(k_p, input_dims)
    params = prepare_params(w1, b1, w2, b2)   # one-time weight prep (hoisted out of fwd)

    def reference(xs):
        h = xs @ w1.T + b1
        h = jnp.where(h > 0, h, 0.2 * h)      # LeakyReLU(negative_slope=0.2)
        return h @ w2.T + b2

    value = jax.block_until_ready(critic_forward(x, *params))
    assert value.shape == (batch, 1)
    assert jnp.allclose(value, reference(x), atol=1e-4, rtol=1e-4)

    # Exercise batch padding and a multi-tile (2-tile, v7x dual-TC) grid.
    x_big = jax.random.normal(k_x2, (1000, input_dims), jnp.float32)
    value_big = jax.block_until_ready(critic_forward(x_big, *params))
    assert value_big.shape == (1000, 1)
    assert jnp.allclose(value_big, reference(x_big), atol=1e-4, rtol=1e-4)

    print("KERNEL_OK")
</pallas_src>

<mosaic_0001>
module attributes {stable_mosaic.version = 11 : i64} {
  func.func @_critic_kernel(%arg0: i32, %arg1: memref<32x128xf32, #tpu.memory_space<vmem>>, %arg2: memref<128x32xf32, #tpu.memory_space<vmem>>, %arg3: memref<128x1xf32, #tpu.memory_space<vmem>>, %arg4: memref<1x128xf32, #tpu.memory_space<vmem>>, %arg5: memref<1xf32, #tpu.memory_space<smem>>, %arg6: memref<1x128xf32, #tpu.memory_space<vmem>>) attributes {dimension_semantics = [#tpu.dimension_semantics<parallel>], iteration_bounds = array<i64: 1>, scalar_prefetch = 0 : i64, scratch_operands = 0 : i64, tpu.core_type = #tpu.core_type<tc>, window_params = [{transform_indices = @transform_0, window_bounds = array<i64: 32, 128>}, {pipeline_mode = #tpu.pipeline_mode<synchronous>, transform_indices = @transform_1, window_bounds = array<i64: 128, 32>}, {pipeline_mode = #tpu.pipeline_mode<synchronous>, transform_indices = @transform_2, window_bounds = array<i64: 128, 1>}, {pipeline_mode = #tpu.pipeline_mode<synchronous>, transform_indices = @transform_3, window_bounds = array<i64: 1, 128>}, {transform_indices = @transform_4, window_bounds = array<i64: 1>}, {transform_indices = @transform_5, window_bounds = array<i64: 1, 128>}]} {
    %c0 = arith.constant 0 : index
    %c0_0 = arith.constant 0 : index
    %0 = vector.load %arg2[%c0, %c0_0] : memref<128x32xf32, #tpu.memory_space<vmem>>, vector<128x32xf32>
    %c0_1 = arith.constant 0 : index
    %c0_2 = arith.constant 0 : index
    %1 = vector.load %arg4[%c0_1, %c0_2] : memref<1x128xf32, #tpu.memory_space<vmem>>, vector<1x128xf32>
    %c0_3 = arith.constant 0 : index
    %2 = memref.load %arg5[%c0_3] : memref<1xf32, #tpu.memory_space<smem>>
    %c0_4 = arith.constant 0 : index
    %c0_5 = arith.constant 0 : index
    %3 = vector.load %arg3[%c0_4, %c0_5] : memref<128x1xf32, #tpu.memory_space<vmem>>, vector<128x1xf32>
    %4 = vector.shape_cast %3 : vector<128x1xf32> to vector<128x1xf32>
    %5 = vector.broadcast %4 : vector<128x1xf32> to vector<128x128xf32>
    %c0_i32 = arith.constant 0 : i32
    %c128_i32 = arith.constant 128 : i32
    %6 = arith.muli %c0_i32, %c128_i32 : i32
    %7 = tpu.assume_multiple %6, 128 : i32
    %c0_6 = arith.constant 0 : index
    %8 = arith.index_cast %7 : i32 to index
    %9 = vector.load %arg1[%c0_6, %8] : memref<32x128xf32, #tpu.memory_space<vmem>>, vector<32x128xf32>
    %cst = arith.constant dense<0.000000e+00> : vector<128x128xf32>
    %10 = tpu.matmul %0, %9, %cst {dimension_numbers = #tpu.dot_dimension_numbers<[1], [0], [0], [1], [0, 0, 1, 1], [], []>} : vector<128x32xf32>, vector<32x128xf32>, vector<128x128xf32> -> vector<128x128xf32>
    %11 = arith.addf %10, %5 : vector<128x128xf32>
    %cst_7 = arith.constant 2.000000e-01 : f32
    %12 = vector.broadcast %cst_7 : f32 to vector<128x128xf32>
    %13 = arith.mulf %12, %11 : vector<128x128xf32>
    %14 = arith.maximumf %11, %13 : vector<128x128xf32>
    %cst_8 = arith.constant dense<0.000000e+00> : vector<1x128xf32>
    %15 = tpu.matmul %1, %14, %cst_8 {dimension_numbers = #tpu.dot_dimension_numbers<[1], [0], [0], [1], [0, 0, 1, 1], [], []>} : vector<1x128xf32>, vector<128x128xf32>, vector<1x128xf32> -> vector<1x128xf32>
    %16 = vector.broadcast %2 : f32 to vector<1x128xf32>
    %17 = arith.addf %15, %16 : vector<1x128xf32>
    %c0_9 = arith.constant 0 : index
    %18 = arith.index_cast %7 : i32 to index
    %19 = vector.load %arg6[%c0_9, %18] : memref<1x128xf32, #tpu.memory_space<vmem>>, vector<1x128xf32>
    tpu.vector_store %arg6[%c0_9, %18], %17 {strides = array<i32>} : memref<1x128xf32, #tpu.memory_space<vmem>>, vector<1x128xf32>,
    %c1_i32 = arith.constant 1 : i32
    return
  }
  func.func @transform_0(%arg0: i32) -> (i32, i32) {
    %c0_i32 = arith.constant 0 : i32
    %c0_i32_0 = arith.constant 0 : i32
    return %c0_i32, %arg0 : i32, i32
  }
  func.func @transform_1(%arg0: i32) -> (i32, i32) {
    %c0_i32 = arith.constant 0 : i32
    %c0_i32_0 = arith.constant 0 : i32
    %c0_i32_1 = arith.constant 0 : i32
    return %c0_i32, %c0_i32_0 : i32, i32
  }
  func.func @transform_2(%arg0: i32) -> (i32, i32) {
    %c0_i32 = arith.constant 0 : i32
    %c0_i32_0 = arith.constant 0 : i32
    %c0_i32_1 = arith.constant 0 : i32
    return %c0_i32, %c0_i32_0 : i32, i32
  }
  func.func @transform_3(%arg0: i32) -> (i32, i32) {
    %c0_i32 = arith.constant 0 : i32
    %c0_i32_0 = arith.constant 0 : i32
    %c0_i32_1 = arith.constant 0 : i32
    return %c0_i32, %c0_i32_0 : i32, i32
  }
  func.func @transform_4(%arg0: i32) -> i32 {
    %c0_i32 = arith.constant 0 : i32
    %c0_i32_0 = arith.constant 0 : i32
    return %c0_i32 : i32
  }
  func.func @transform_5(%arg0: i32) -> (i32, i32) {
    %c0_i32 = arith.constant 0 : i32
    %c0_i32_0 = arith.constant 0 : i32
    return %c0_i32, %arg0 : i32, i32
  }
}

</mosaic_0001>

<llo_original>
// kernel: critic_forward.1
$region0: #{critic_forward.1}
  #allocation0 [shape = 'u32[]', space=smem, size = 0x4, offset = 0x4, fixed_abs, tag = 'smem constant byte address 0x4 - core index']
  #allocation1 [shape = 'u32[144,128]{1,0:T(1,128)}', space=vmem, size = 0x12000, scoped, tag = 'internal scratch']
  #allocation2 [shape = 'f32[1]{0:T(128)S(6)}', space=smem, size = 0x200, scoped, tag = 'scoped memory for critic_forward.1']
  %s0 = inlined_call_operand.vmem [shape: f32[32,128], index: 0, kind: input, shape index: {}]
  %s1 = inlined_call_operand.vmem [shape: f32[128,32], index: 1, kind: input, shape index: {}]
  %s2 = inlined_call_operand.vmem [shape: f32[128,1], index: 2, kind: input, shape index: {}]
  %s3 = inlined_call_operand.vmem [shape: f32[1,128], index: 3, kind: input, shape index: {}]
  %s4 = inlined_call_operand.<no memory space> [shape: f32[1], index: 4, kind: input, shape index: {}]
  %s5 = inlined_call_operand.vmem [shape: f32[1,128], index: 5, kind: output, shape index: {}]
  %s6 = sld [smem:[#allocation0]]
  $region30: #{critic_forward.1} parent=0
    _
  %s8 = ssub.s32 1, %s6
  %s9 = scalar_select 0, %s8, %s6
  %10 = sst [smem:[#allocation2]] %s4
  // Predicated region
  $region2: #{critic_forward.1} parent=0 // pred_check
    _
  $region3: #{critic_forward.1} parent=0 // pred_check_branch
    %12 = sbr.rel (0) target = $region5
  $region4: #{critic_forward.1} parent=0 // pred_region
    _
  $region5: #{critic_forward.1} parent=0 // pred_fallthru
    _
  // Predicated region
  $region6: #{critic_forward.1} parent=0 // pred_check
    _
  $region7: #{critic_forward.1} parent=0 // pred_check_branch
    %14 = sbr.rel (0) target = $region9
  $region8: #{critic_forward.1} parent=0 // pred_region
    _
  $region9: #{critic_forward.1} parent=0 // pred_fallthru
    _
  // Predicated region
  $region10: #{critic_forward.1} parent=0 // pred_check
    _
  $region11: #{critic_forward.1} parent=0 // pred_check_branch
    %16 = sbr.rel (0) target = $region13
  $region12: #{critic_forward.1} parent=0 // pred_region
    _
  $region13: #{critic_forward.1} parent=0 // pred_fallthru
    _
  // Predicated region
  $region14: #{critic_forward.1} parent=0 // pred_check
    _
  $region15: #{critic_forward.1} parent=0 // pred_check_branch
    %18 = sbr.rel (0) target = $region17
  $region16: #{critic_forward.1} parent=0 // pred_region
    _
  $region17: #{critic_forward.1} parent=0 // pred_fallthru
    _
  // Predicated region
  $region18: #{critic_forward.1} parent=0 // pred_check
    _
  $region19: #{critic_forward.1} parent=0 // pred_check_branch
    %20 = sbr.rel (0) target = $region21
  $region20: #{critic_forward.1} parent=0 // pred_region
    _
  $region21: #{critic_forward.1} parent=0 // pred_fallthru
    _
  %v21 = vld [vmem:[%s1] sm:$0xff]
  %v22 = vld [vmem:[%s1 + $0x8] sm:$0xff]
  %v23 = vld [vmem:[%s1 + $0x10] sm:$0xff]
  %v24 = vld [vmem:[%s1 + $0x18] sm:$0xff]
  %v25 = vld [vmem:[%s1 + $0x20] sm:$0xff]
  %v26 = vld [vmem:[%s1 + $0x28] sm:$0xff]
  %v27 = vld [vmem:[%s1 + $0x30] sm:$0xff]
  %v28 = vld [vmem:[%s1 + $0x38] sm:$0xff]
  %v29 = vld [vmem:[%s1 + $0x40] sm:$0xff]
  %v30 = vld [vmem:[%s1 + $0x48] sm:$0xff]
  %v31 = vld [vmem:[%s1 + $0x50] sm:$0xff]
  %v32 = vld [vmem:[%s1 + $0x58] sm:$0xff]
  %v33 = vld [vmem:[%s1 + $0x60] sm:$0xff]
  %v34 = vld [vmem:[%s1 + $0x68] sm:$0xff]
  %v35 = vld [vmem:[%s1 + $0x70] sm:$0xff]
  %v36 = vld [vmem:[%s1 + $0x78] sm:$0xff]
  %v37 = vld [vmem:[%s3] sm:$0x1]
  %s38 = sld [smem:[#allocation2]]
  %v39 = vld [vmem:[%s2] sm:$0xff]
  %v40 = vld [vmem:[%s2 + $0x8] sm:$0xff]
  %v41 = vld [vmem:[%s2 + $0x10] sm:$0xff]
  %v42 = vld [vmem:[%s2 + $0x18] sm:$0xff]
  %v43 = vld [vmem:[%s2 + $0x20] sm:$0xff]
  %v44 = vld [vmem:[%s2 + $0x28] sm:$0xff]
  %v45 = vld [vmem:[%s2 + $0x30] sm:$0xff]
  %v46 = vld [vmem:[%s2 + $0x38] sm:$0xff]
  %v47 = vld [vmem:[%s2 + $0x40] sm:$0xff]
  %v48 = vld [vmem:[%s2 + $0x48] sm:$0xff]
  %v49 = vld [vmem:[%s2 + $0x50] sm:$0xff]
  %v50 = vld [vmem:[%s2 + $0x58] sm:$0xff]
  %v51 = vld [vmem:[%s2 + $0x60] sm:$0xff]
  %v52 = vld [vmem:[%s2 + $0x68] sm:$0xff]
  %v53 = vld [vmem:[%s2 + $0x70] sm:$0xff]
  %v54 = vld [vmem:[%s2 + $0x78] sm:$0xff]
  %56 = vset.pattern.permute.xlu0 0
  %57 = vperm.xlu0 %56, %v39
  %v58 = vpop.permute.xlu0 %57
  %61 = vset.pattern.permute.xlu0 0
  %62 = vperm.xlu0 %61, %v40
  %v63 = vpop.permute.xlu0 %62
  %66 = vset.pattern.permute.xlu0 0
  %67 = vperm.xlu0 %66, %v41
  %v68 = vpop.permute.xlu0 %67
  %71 = vset.pattern.permute.xlu0 0
  %72 = vperm.xlu0 %71, %v42
  %v73 = vpop.permute.xlu0 %72
  %76 = vset.pattern.permute.xlu0 0
  %77 = vperm.xlu0 %76, %v43
  %v78 = vpop.permute.xlu0 %77
  %81 = vset.pattern.permute.xlu0 0
  %82 = vperm.xlu0 %81, %v44
  %v83 = vpop.permute.xlu0 %82
  %86 = vset.pattern.permute.xlu0 0
  %87 = vperm.xlu0 %86, %v45
  %v88 = vpop.permute.xlu0 %87
  %91 = vset.pattern.permute.xlu0 0
  %92 = vperm.xlu0 %91, %v46
  %v93 = vpop.permute.xlu0 %92
  %96 = vset.pattern.permute.xlu0 0
  %97 = vperm.xlu0 %96, %v47
  %v98 = vpop.permute.xlu0 %97
  %101 = vset.pattern.permute.xlu0 0
  %102 = vperm.xlu0 %101, %v48
  %v103 = vpop.permute.xlu0 %102
  %106 = vset.pattern.permute.xlu0 0
  %107 = vperm.xlu0 %106, %v49
  %v108 = vpop.permute.xlu0 %107
  %111 = vset.pattern.permute.xlu0 0
  %112 = vperm.xlu0 %111, %v50
  %v113 = vpop.permute.xlu0 %112
  %116 = vset.pattern.permute.xlu0 0
  %117 = vperm.xlu0 %116, %v51
  %v118 = vpop.permute.xlu0 %117
  %121 = vset.pattern.permute.xlu0 0
  %122 = vperm.xlu0 %121, %v52
  %v123 = vpop.permute.xlu0 %122
  %126 = vset.pattern.permute.xlu0 0
  %127 = vperm.xlu0 %126, %v53
  %v128 = vpop.permute.xlu0 %127
  %131 = vset.pattern.permute.xlu0 0
  %132 = vperm.xlu0 %131, %v54
  %v133 = vpop.permute.xlu0 %132
  %v135 = vld [vmem:[%s0] sm:$0xff]
  %v136 = vld [vmem:[%s0 + $0x8] sm:$0xff]
  %v137 = vld [vmem:[%s0 + $0x10] sm:$0xff]
  %v138 = vld [vmem:[%s0 + $0x18] sm:$0xff]
  %vm139 = vcmask 261120
  %v141 = vsel %vm139, %v21, 0
  %v144 = vsel %vm139, %v22, 0
  %v147 = vsel %vm139, %v23, 0
  %v150 = vsel %vm139, %v24, 0
  %v153 = vsel %vm139, %v25, 0
  %v156 = vsel %vm139, %v26, 0
  %v159 = vsel %vm139, %v27, 0
  %v162 = vsel %vm139, %v28, 0
  %v165 = vsel %vm139, %v29, 0
  %v168 = vsel %vm139, %v30, 0
  %v171 = vsel %vm139, %v31, 0
  %v174 = vsel %vm139, %v32, 0
  %v177 = vsel %vm139, %v33, 0
  %v180 = vsel %vm139, %v34, 0
  %v183 = vsel %vm139, %v35, 0
  %v186 = vsel %vm139, %v36, 0
  %188 = vmatprep.subr.mxu0 0.0
  %189 = vmatpush1.msra.mxu0 %v135
  %190 = vmatprep.subr.mxu0 0.0
  %191 = vmatpush1.msra.mxu0 %v136
  %192 = vmatprep.subr.mxu0 0.0
  %193 = vmatpush1.msra.mxu0 %v137
  %194 = vmatprep.subr.mxu0 0.0
  %195 = vmatpush1.msra.mxu0 %v138
  %196 = vmatprep.subr.mxu0 0.0
  %197 = vmatpush1.msra.mxu0 0.0
  %198 = vmatprep.subr.mxu0 0.0
  %199 = vmatpush1.msra.mxu0 0.0
  %200 = vmatprep.subr.mxu0 0.0
  %201 = vmatpush1.msra.mxu0 0.0
  %202 = vmatprep.subr.mxu0 0.0
  %203 = vmatpush1.msra.mxu0 0.0
  %204 = vmatprep.subr.mxu0 0.0
  %205 = vmatpush1.msra.mxu0 0.0
  %206 = vmatprep.subr.mxu0 0.0
  %207 = vmatpush1.msra.mxu0 0.0
  %208 = vmatprep.subr.mxu0 0.0
  %209 = vmatpush1.msra.mxu0 0.0
  %210 = vmatprep.subr.mxu0 0.0
  %211 = vmatpush1.msra.mxu0 0.0
  %212 = vmatprep.subr.mxu0 0.0
  %213 = vmatpush1.msra.mxu0 0.0
  %214 = vmatprep.subr.mxu0 0.0
  %215 = vmatpush1.msra.mxu0 0.0
  %216 = vmatprep.subr.mxu0 0.0
  %217 = vmatpush1.msra.mxu0 0.0
  %218 = vmatprep.subr.mxu0 0.0
  %219 = vmatpush1.msra.mxu0 0.0
  %220 = vmatprep.subr.mxu0 0.0
  %221 = vmatpush1.msra.mxu0 0.0
  %222 = vmatprep.subr.mxu0 0.0
  %223 = vmatpush1.msra.mxu0 0.0
  %224 = vmatprep.subr.mxu0 0.0
  %225 = vmatpush1.msra.mxu0 0.0
  %226 = vmatprep.subr.mxu0 0.0
  %227 = vmatpush1.msra.mxu0 0.0
  %228 = vmatprep.subr.mxu0 0.0
  %229 = vmatpush1.msra.mxu0 0.0
  %230 = vmatprep.subr.mxu0 0.0
  %231 = vmatpush1.msra.mxu0 0.0
  %232 = vmatprep.subr.mxu0 0.0
  %233 = vmatpush1.msra.mxu0 0.0
  %234 = vmatprep.subr.mxu0 0.0
  %235 = vmatpush1.msra.mxu0 0.0
  %236 = vmatprep.subr.mxu0 0.0
  %237 = vmatpush1.msra.mxu0 0.0
  %238 = vmatprep.subr.mxu0 0.0
  %239 = vmatpush1.msra.mxu0 0.0
  %240 = vmatprep.subr.mxu0 0.0
  %241 = vmatpush1.msra.mxu0 0.0
  %242 = vmatprep.subr.mxu0 0.0
  %243 = vmatpush1.msra.mxu0 0.0
  %244 = vmatprep.subr.mxu0 0.0
  %245 = vmatpush1.msra.mxu0 0.0
  %246 = vmatprep.subr.mxu0 0.0
  %247 = vmatpush1.msra.mxu0 0.0
  %248 = vmatprep.subr.mxu0 0.0
  %249 = vmatpush1.msra.mxu0 0.0
  %250 = vmatprep.subr.mxu0 0.0
  %251 = vmatpush1.msra.mxu0 0.0
  %252 = vmatprep.mubr.f32.mxu0 0.0
  %253 = vmatmul.mubr.f32.gmra.mrb[0].mxu0 %v141
  %v254 = vpop.f32.mrb[0].mxu0
  %v255 = vadd.f32 %v58, %v254
  %v256 = vpop.f32.mrb[0].mxu0
  %257 = vmatprep.mubr.f32.mxu0 0.0
  %258 = vmatmul.mubr.f32.gmra.mrb[0].mxu0 %v144
  %v259 = vpop.f32.mrb[0].mxu0
  %v260 = vadd.f32 %v63, %v259
  %v261 = vpop.f32.mrb[0].mxu0
  %262 = vmatprep.mubr.f32.mxu0 0.0
  %263 = vmatmul.mubr.f32.gmra.mrb[0].mxu0 %v147
  %v264 = vpop.f32.mrb[0].mxu0
  %v265 = vadd.f32 %v68, %v264
  %v266 = vpop.f32.mrb[0].mxu0
  %267 = vmatprep.mubr.f32.mxu0 0.0
  %268 = vmatmul.mubr.f32.gmra.mrb[0].mxu0 %v150
  %v269 = vpop.f32.mrb[0].mxu0
  %v270 = vadd.f32 %v73, %v269
  %v271 = vpop.f32.mrb[0].mxu0
  %272 = vmatprep.mubr.f32.mxu0 0.0
  %273 = vmatmul.mubr.f32.gmra.mrb[0].mxu0 %v153
  %v274 = vpop.f32.mrb[0].mxu0
  %v275 = vadd.f32 %v78, %v274
  %v276 = vpop.f32.mrb[0].mxu0
  %277 = vmatprep.mubr.f32.mxu0 0.0
  %278 = vmatmul.mubr.f32.gmra.mrb[0].mxu0 %v156
  %v279 = vpop.f32.mrb[0].mxu0
  %v280 = vadd.f32 %v83, %v279
  %v281 = vpop.f32.mrb[0].mxu0
  %282 = vmatprep.mubr.f32.mxu0 0.0
  %283 = vmatmul.mubr.f32.gmra.mrb[0].mxu0 %v159
  %v284 = vpop.f32.mrb[0].mxu0
  %v285 = vadd.f32 %v88, %v284
  %v286 = vpop.f32.mrb[0].mxu0
  %287 = vmatprep.mubr.f32.mxu0 0.0
  %288 = vmatmul.mubr.f32.gmra.mrb[0].mxu0 %v162
  %v289 = vpop.f32.mrb[0].mxu0
  %v290 = vadd.f32 %v93, %v289
  %v291 = vpop.f32.mrb[0].mxu0
  %292 = vmatprep.mubr.f32.mxu0 0.0
  %293 = vmatmul.mubr.f32.gmra.mrb[0].mxu0 %v165
  %v294 = vpop.f32.mrb[0].mxu0
  %v295 = vadd.f32 %v98, %v294
  %v296 = vpop.f32.mrb[0].mxu0
  %297 = vmatprep.mubr.f32.mxu0 0.0
  %298 = vmatmul.mubr.f32.gmra.mrb[0].mxu0 %v168
  %v299 = vpop.f32.mrb[0].mxu0
  %v300 = vadd.f32 %v103, %v299
  %v301 = vpop.f32.mrb[0].mxu0
  %302 = vmatprep.mubr.f32.mxu0 0.0
  %303 = vmatmul.mubr.f32.gmra.mrb[0].mxu0 %v171
  %v304 = vpop.f32.mrb[0].mxu0
  %v305 = vadd.f32 %v108, %v304
  %v306 = vpop.f32.mrb[0].mxu0
  %307 = vmatprep.mubr.f32.mxu0 0.0
  %308 = vmatmul.mubr.f32.gmra.mrb[0].mxu0 %v174
  %v309 = vpop.f32.mrb[0].mxu0
  %v310 = vadd.f32 %v113, %v309
  %v311 = vpop.f32.mrb[0].mxu0
  %312 = vmatprep.mubr.f32.mxu0 0.0
  %313 = vmatmul.mubr.f32.gmra.mrb[0].mxu0 %v177
  %v314 = vpop.f32.mrb[0].mxu0
  %v315 = vadd.f32 %v118, %v314
  %v316 = vpop.f32.mrb[0].mxu0
  %317 = vmatprep.mubr.f32.mxu0 0.0
  %318 = vmatmul.mubr.f32.gmra.mrb[0].mxu0 %v180
  %v319 = vpop.f32.mrb[0].mxu0
  %v320 = vadd.f32 %v123, %v319
  %v321 = vpop.f32.mrb[0].mxu0
  %322 = vmatprep.mubr.f32.mxu0 0.0
  %323 = vmatmul.mubr.f32.gmra.mrb[0].mxu0 %v183
  %v324 = vpop.f32.mrb[0].mxu0
  %v325 = vadd.f32 %v128, %v324
  %v326 = vpop.f32.mrb[0].mxu0
  %327 = vmatprep.mubr.f32.mxu0 0.0
  %328 = vmatmul.mubr.f32.gmra.mrb[0].mxu0 %v186
  %v329 = vpop.f32.mrb[0].mxu0
  %v330 = vadd.f32 %v133, %v329
  %v331 = vpop.f32.mrb[0].mxu0
  %332 = vdwg.mxu0
  %v333 = vmul.f32 %v255, 0.2
  %v334 = vmul.f32 %v260, 0.2
  %v335 = vmul.f32 %v265, 0.2
  %v336 = vmul.f32 %v270, 0.2
  %v337 = vmul.f32 %v275, 0.2
  %v338 = vmul.f32 %v280, 0.2
  %v339 = vmul.f32 %v285, 0.2
  %v340 = vmul.f32 %v290, 0.2
  %v341 = vmul.f32 %v295, 0.2
  %v342 = vmul.f32 %v300, 0.2
  %v343 = vmul.f32 %v305, 0.2
  %v344 = vmul.f32 %v310, 0.2
  %v345 = vmul.f32 %v315, 0.2
  %v346 = vmul.f32 %v320, 0.2
  %v347 = vmul.f32 %v325, 0.2
  %v348 = vmul.f32 %v330, 0.2
  %v349 = vmax.f32 %v255, %v333
  %v350 = vmax.f32 %v260, %v334
  %v351 = vmax.f32 %v265, %v335
  %v352 = vmax.f32 %v270, %v336
  %v353 = vmax.f32 %v275, %v337
  %v354 = vmax.f32 %v280, %v338
  %v355 = vmax.f32 %v285, %v339
  %v356 = vmax.f32 %v290, %v340
  %v357 = vmax.f32 %v295, %v341
  %v358 = vmax.f32 %v300, %v342
  %v359 = vmax.f32 %v305, %v343
  %v360 = vmax.f32 %v310, %v344
  %v361 = vmax.f32 %v315, %v345
  %v362 = vmax.f32 %v320, %v346
  %v363 = vmax.f32 %v325, %v347
  %v364 = vmax.f32 %v330, %v348
  %v365 = vstv %s38
  %366 = vmatprep.subr.mxu0 0.0
  %367 = vmatpush1.msra.mxu0 %v349
  %368 = vmatprep.subr.mxu0 0.0
  %369 = vmatpush1.msra.mxu0 %v350
  %370 = vmatprep.subr.mxu0 0.0
  %371 = vmatpush1.msra.mxu0 %v351
  %372 = vmatprep.subr.mxu0 0.0
  %373 = vmatpush1.msra.mxu0 %v352
  %374 = vmatprep.subr.mxu0 0.0
  %375 = vmatpush1.msra.mxu0 %v353
  %376 = vmatprep.subr.mxu0 0.0
  %377 = vmatpush1.msra.mxu0 %v354
  %378 = vmatprep.subr.mxu0 0.0
  %379 = vmatpush1.msra.mxu0 %v355
  %380 = vmatprep.subr.mxu0 0.0
  %381 = vmatpush1.msra.mxu0 %v356
  %382 = vmatprep.subr.mxu0 0.0
  %383 = vmatpush1.msra.mxu0 %v357
  %384 = vmatprep.subr.mxu0 0.0
  %385 = vmatpush1.msra.mxu0 %v358
  %386 = vmatprep.subr.mxu0 0.0
  %387 = vmatpush1.msra.mxu0 %v359
  %388 = vmatprep.subr.mxu0 0.0
  %389 = vmatpush1.msra.mxu0 %v360
  %390 = vmatprep.subr.mxu0 0.0
  %391 = vmatpush1.msra.mxu0 %v361
  %392 = vmatprep.subr.mxu0 0.0
  %393 = vmatpush1.msra.mxu0 %v362
  %394 = vmatprep.subr.mxu0 0.0
  %395 = vmatpush1.msra.mxu0 %v363
  %396 = vmatprep.subr.mxu0 0.0
  %397 = vmatpush1.msra.mxu0 %v364
  %398 = vmatprep.subr.mxu0 0.0
  %399 = vmatpush1.msra.mxu0 0.0
  %400 = vmatprep.subr.mxu0 0.0
  %401 = vmatpush1.msra.mxu0 0.0
  %402 = vmatprep.subr.mxu0 0.0
  %403 = vmatpush1.msra.mxu0 0.0
  %404 = vmatprep.subr.mxu0 0.0
  %405 = vmatpush1.msra.mxu0 0.0
  %406 = vmatprep.subr.mxu0 0.0
  %407 = vmatpush1.msra.mxu0 0.0
  %408 = vmatprep.subr.mxu0 0.0
  %409 = vmatpush1.msra.mxu0 0.0
  %410 = vmatprep.subr.mxu0 0.0
  %411 = vmatpush1.msra.mxu0 0.0
  %412 = vmatprep.subr.mxu0 0.0
  %413 = vmatpush1.msra.mxu0 0.0
  %414 = vmatprep.subr.mxu0 0.0
  %415 = vmatpush1.msra.mxu0 0.0
  %416 = vmatprep.subr.mxu0 0.0
  %417 = vmatpush1.msra.mxu0 0.0
  %418 = vmatprep.subr.mxu0 0.0
  %419 = vmatpush1.msra.mxu0 0.0
  %420 = vmatprep.subr.mxu0 0.0
  %421 = vmatpush1.msra.mxu0 0.0
  %422 = vmatprep.subr.mxu0 0.0
  %423 = vmatpush1.msra.mxu0 0.0
  %424 = vmatprep.subr.mxu0 0.0
  %425 = vmatpush1.msra.mxu0 0.0
  %426 = vmatprep.subr.mxu0 0.0
  %427 = vmatpush1.msra.mxu0 0.0
  %428 = vmatprep.subr.mxu0 0.0
  %429 = vmatpush1.msra.mxu0 0.0
  %430 = vmatprep.mubr.f32.mxu0 0.0
  %431 = vmatmul.mubr.f32.gmra.mrb[0].mxu0 %v37
  %v432 = vpop.f32.mrb[0].mxu0
  %v433 = vadd.f32 %v365, %v432
  %v434 = vpop.f32.mrb[0].mxu0
  %435 = vdwg.mxu0
  %436 = vst [vmem:[%s5] sm:$0x1] %v433
  // Predicated region
  $region22: #{critic_forward.1} parent=0 // pred_check
    _
  $region23: #{critic_forward.1} parent=0 // pred_check_branch
    %438 = sbr.rel (0) target = $region25
  $region24: #{critic_forward.1} parent=0 // pred_region
    _
  $region25: #{critic_forward.1} parent=0 // pred_fallthru
    _
  // Predicated region
  $region26: #{critic_forward.1} parent=0 // pred_check
    _
  $region27: #{critic_forward.1} parent=0 // pred_check_branch
    %440 = sbr.rel (0) target = $region29
  $region28: #{critic_forward.1} parent=0 // pred_region
    _
  $region29: #{critic_forward.1} parent=0 // pred_fallthru
    _

</llo_original>
